<compile_context>
chip_gen: v5e
topology: v5e:2x2
jax: 0.10.0
libtpu: 0.0.40
codegen_flags: <defaults>
</compile_context>

<pallas_src>
import functools

import jax
import jax.numpy as jnp
from jax.experimental import pallas as pl
from jax.experimental.pallas import tpu as pltpu

_TILE = 256  # batch-tile granularity (v6e/v7x MXU result width; multiple of 128 for v5e)


def _mlp_kernel(xt_ref, w1_ref, b1_ref, w2_ref, b2_ref, w3_ref, b3_ref, o_ref):
    xt = xt_ref[...]                                             # (F, TB) bf16, lane-dense
    # fc1: (H1, F) @ (F, TB) -> (H1, TB), f32 accumulation on the MXU.
    h1 = jnp.dot(w1_ref[...], xt, preferred_element_type=jnp.float32)
    h1 = jnp.maximum(h1 + b1_ref[...], 0.0)                      # bias (H1, 1) broadcasts over lanes
    # fc2: (H2, H1) @ (H1, TB) -> (H2, TB)
    h2 = jnp.dot(w2_ref[...], h1.astype(jnp.bfloat16),
                 preferred_element_type=jnp.float32)
    h2 = jnp.maximum(h2 + b2_ref[...], 0.0)
    # fc3 on the VPU/XLU: (H2, TB) * (H2, 1) -> sublane reduce -> lane-dense (1, TB) row.
    logits = jnp.sum(h2 * w3_ref[...], axis=0, keepdims=True) + b3_ref[...]
    o_ref[...] = jax.nn.sigmoid(logits)


def _cdiv(a, b):
    return -(-a // b)


def _round_up(n, m):
    return ((n + m - 1) // m) * m


def mlp_net(x, w1, b1, w2, b2, w3, b3, *, block_b=4096):
    """x: (B, F); weights in PyTorch layout (out, in); biases (out, 1).
    Returns sigmoid(fc3(relu(fc2(relu(fc1(x)))))) with shape (B, 1), float32
    (bf16-precision: x and weights are fed to the MXU in bf16, f32 accumulation)."""
    assert block_b % _TILE == 0
    B, F = x.shape
    H1 = w1.shape[0]
    H2 = w2.shape[0]

    # Grid steps: honor block_b, and use >=2 steps for batches spanning more than one
    # minimal tile so both v7x TensorCores get work; balance tile sizes across steps.
    G = max(_cdiv(B, block_b), 2 if B > _TILE else 1)
    TB = min(block_b, _round_up(_cdiv(B, G), _TILE))
    G = _cdiv(B, TB)
    B_pad = G * TB

    # Single fused wrapper pass over x: transpose + bf16 cast + pad -> lane-dense (F, B_pad).
    xt = x.T.astype(jnp.bfloat16)
    if B_pad != B:
        xt = jnp.pad(xt, ((0, 0), (0, B_pad - B)))

    # MXU operands in bf16; biases and the fc3 column stay f32 (VPU math in f32).
    w1b = w1.astype(jnp.bfloat16)
    w2b = w2.astype(jnp.bfloat16)
    w3col = w3.reshape(H2, 1)                                    # (H2, 1) f32 for VPU fc3

    # Weights/biases: full blocks with constant index_map -> DMA'd once, VMEM-resident.
    resident = lambda a: pl.BlockSpec(a.shape, lambda i: (0, 0))

    out = pl.pallas_call(
        _mlp_kernel,
        out_shape=jax.ShapeDtypeStruct((1, B_pad), jnp.float32),
        grid_spec=pltpu.PrefetchScalarGridSpec(
            num_scalar_prefetch=0,
            grid=(G,),
            in_specs=[
                pl.BlockSpec((F, TB), lambda i: (0, i)),         # lane-dense x^T tile
                resident(w1b), resident(b1),
                resident(w2b), resident(b2),
                resident(w3col), resident(b3),
            ],
            out_specs=pl.BlockSpec((1, TB), lambda i: (0, i)),   # lane-dense output slab
        ),
        compiler_params=pltpu.CompilerParams(
            dimension_semantics=("parallel",),       # shard batch tiles over v7x's 2 TCs
            vmem_limit_bytes=32 * 1024 * 1024,       # explicit, portable (v7x 64 MiB VMEM)
        ),
    )(xt, w1b, b1, w2b, b2, w3col, b3)

    return out.reshape(-1)[:B].reshape(B, 1)


def init_params(key, in_features, hidden_sizes):
    """nn.Linear-style init: W (out, in), b (out, 1), uniform +/- 1/sqrt(fan_in)."""
    dims = [in_features, hidden_sizes[0], hidden_sizes[1], 1]
    params = []
    for i in range(3):
        fan_in, fan_out = dims[i], dims[i + 1]
        key, kw, kb = jax.random.split(key, 3)
        bound = 1.0 / (fan_in ** 0.5)
        w = jax.random.uniform(kw, (fan_out, fan_in), jnp.float32, -bound, bound)
        b = jax.random.uniform(kb, (fan_out, 1), jnp.float32, -bound, bound)
        params += [w, b]
    return params


if __name__ == "__main__":
    # MLPNet(input_size=16, hidden_size=[64, 32], bidirectional=True)
    input_size = 16
    hidden_size = (64, 32)
    bidirectional = True
    in_features = 2 * input_size if bidirectional else input_size  # 32

    key = jax.random.PRNGKey(0)
    key, kx = jax.random.split(key)
    w1, b1, w2, b2, w3, b3 = init_params(key, in_features, hidden_size)

    def reference(x):
        h1 = jnp.maximum(x @ w1.T + b1.T, 0.0)
        h2 = jnp.maximum(h1 @ w2.T + b2.T, 0.0)
        return jax.nn.sigmoid(h2 @ w3.T + b3.T)

    fwd = jax.jit(functools.partial(mlp_net, w1=w1, b1=b1, w2=w2, b2=b2,
                                    w3=w3, b3=b3))

    # Small shape consistent with the module (single padded tile, grid == 1).
    batch = 8
    x = jax.random.normal(kx, (batch, in_features), jnp.float32)
    out = jax.block_until_ready(fwd(x))
    assert out.shape == (batch, 1)
    assert jnp.allclose(out, reference(x), atol=2e-2, rtol=2e-2), "mismatch (small batch)"

    # Larger batch to exercise the multi-tile pipelined path (G > 1, balanced padding).
    batch2 = 1100
    x2 = jax.random.normal(jax.random.PRNGKey(1), (batch2, in_features), jnp.float32)
    out2 = jax.block_until_ready(fwd(x2))
    assert out2.shape == (batch2, 1)
    assert jnp.allclose(out2, reference(x2), atol=2e-2, rtol=2e-2), "mismatch (large batch)"

    print("KERNEL_OK")
</pallas_src>

<mosaic_0001>
module attributes {stable_mosaic.version = 11 : i64} {
  func.func @_mlp_kernel(%arg0: i32, %arg1: memref<32x256xbf16, #tpu.memory_space<vmem>>, %arg2: memref<64x32xbf16, #tpu.memory_space<vmem>>, %arg3: memref<64x1xf32, #tpu.memory_space<vmem>>, %arg4: memref<32x64xbf16, #tpu.memory_space<vmem>>, %arg5: memref<32x1xf32, #tpu.memory_space<vmem>>, %arg6: memref<32x1xf32, #tpu.memory_space<vmem>>, %arg7: memref<1x1xf32, #tpu.memory_space<vmem>>, %arg8: memref<1x256xf32, #tpu.memory_space<vmem>>) attributes {dimension_semantics = [#tpu.dimension_semantics<parallel>], iteration_bounds = array<i64: 1>, scalar_prefetch = 0 : i64, scratch_operands = 0 : i64, tpu.core_type = #tpu.core_type<tc>, window_params = [{transform_indices = @transform_0, window_bounds = array<i64: 32, 256>}, {pipeline_mode = #tpu.pipeline_mode<synchronous>, transform_indices = @transform_1, window_bounds = array<i64: 64, 32>}, {pipeline_mode = #tpu.pipeline_mode<synchronous>, transform_indices = @transform_2, window_bounds = array<i64: 64, 1>}, {pipeline_mode = #tpu.pipeline_mode<synchronous>, transform_indices = @transform_3, window_bounds = array<i64: 32, 64>}, {pipeline_mode = #tpu.pipeline_mode<synchronous>, transform_indices = @transform_4, window_bounds = array<i64: 32, 1>}, {pipeline_mode = #tpu.pipeline_mode<synchronous>, transform_indices = @transform_5, window_bounds = array<i64: 32, 1>}, {pipeline_mode = #tpu.pipeline_mode<synchronous>, transform_indices = @transform_6, window_bounds = array<i64: 1, 1>}, {transform_indices = @transform_7, window_bounds = array<i64: 1, 256>}]} {
    %c0 = arith.constant 0 : index
    %c0_0 = arith.constant 0 : index
    %0 = vector.load %arg1[%c0, %c0_0] : memref<32x256xbf16, #tpu.memory_space<vmem>>, vector<32x256xbf16>
    %c0_1 = arith.constant 0 : index
    %c0_2 = arith.constant 0 : index
    %1 = vector.load %arg2[%c0_1, %c0_2] : memref<64x32xbf16, #tpu.memory_space<vmem>>, vector<64x32xbf16>
    %cst = arith.constant dense<0.000000e+00> : vector<64x256xf32>
    %2 = tpu.matmul %1, %0, %cst {dimension_numbers = #tpu.dot_dimension_numbers<[1], [0], [0], [1], [0, 0, 1, 1], [], []>} : vector<64x32xbf16>, vector<32x256xbf16>, vector<64x256xf32> -> vector<64x256xf32>
    %c0_3 = arith.constant 0 : index
    %c0_4 = arith.constant 0 : index
    %3 = vector.load %arg3[%c0_3, %c0_4] : memref<64x1xf32, #tpu.memory_space<vmem>>, vector<64x1xf32>
    %4 = vector.broadcast %3 : vector<64x1xf32> to vector<64x256xf32>
    %5 = arith.addf %2, %4 : vector<64x256xf32>
    %cst_5 = arith.constant 0.000000e+00 : f32
    %6 = vector.broadcast %cst_5 : f32 to vector<64x256xf32>
    %7 = arith.maximumf %5, %6 : vector<64x256xf32>
    %c0_6 = arith.constant 0 : index
    %c0_7 = arith.constant 0 : index
    %8 = vector.load %arg4[%c0_6, %c0_7] : memref<32x64xbf16, #tpu.memory_space<vmem>>, vector<32x64xbf16>
    %9 = arith.truncf %7 : vector<64x256xf32> to vector<64x256xbf16>
    %cst_8 = arith.constant dense<0.000000e+00> : vector<32x256xf32>
    %10 = tpu.matmul %8, %9, %cst_8 {dimension_numbers = #tpu.dot_dimension_numbers<[1], [0], [0], [1], [0, 0, 1, 1], [], []>} : vector<32x64xbf16>, vector<64x256xbf16>, vector<32x256xf32> -> vector<32x256xf32>
    %c0_9 = arith.constant 0 : index
    %c0_10 = arith.constant 0 : index
    %11 = vector.load %arg5[%c0_9, %c0_10] : memref<32x1xf32, #tpu.memory_space<vmem>>, vector<32x1xf32>
    %12 = vector.broadcast %11 : vector<32x1xf32> to vector<32x256xf32>
    %13 = arith.addf %10, %12 : vector<32x256xf32>
    %cst_11 = arith.constant 0.000000e+00 : f32
    %14 = vector.broadcast %cst_11 : f32 to vector<32x256xf32>
    %15 = arith.maximumf %13, %14 : vector<32x256xf32>
    %c0_12 = arith.constant 0 : index
    %c0_13 = arith.constant 0 : index
    %16 = vector.load %arg6[%c0_12, %c0_13] : memref<32x1xf32, #tpu.memory_space<vmem>>, vector<32x1xf32>
    %17 = vector.broadcast %16 : vector<32x1xf32> to vector<32x256xf32>
    %18 = arith.mulf %15, %17 : vector<32x256xf32>
    %cst_14 = arith.constant dense<0.000000e+00> : vector<256xf32>
    %19 = vector.multi_reduction <add>, %18, %cst_14 [0] : vector<32x256xf32> to vector<256xf32>
    %20 = vector.shape_cast %19 : vector<256xf32> to vector<1x256xf32>
    %c0_15 = arith.constant 0 : index
    %c0_16 = arith.constant 0 : index
    %21 = vector.load %arg7[%c0_15, %c0_16] : memref<1x1xf32, #tpu.memory_space<vmem>>, vector<1x1xf32>
    %22 = vector.broadcast %21 : vector<1x1xf32> to vector<1x256xf32>
    %23 = arith.addf %20, %22 : vector<1x256xf32>
    %24 = arith.negf %23 : vector<1x256xf32>
    %25 = math.exp %24 : vector<1x256xf32>
    %cst_17 = arith.constant 1.000000e+00 : f32
    %26 = vector.broadcast %cst_17 : f32 to vector<1x256xf32>
    %27 = arith.addf %26, %25 : vector<1x256xf32>
    %28 = arith.divf %26, %27 : vector<1x256xf32>
    %c0_18 = arith.constant 0 : index
    %c0_19 = arith.constant 0 : index
    %29 = vector.load %arg8[%c0_18, %c0_19] : memref<1x256xf32, #tpu.memory_space<vmem>>, vector<1x256xf32>
    tpu.vector_store %arg8[%c0_18, %c0_19], %28 {strides = array<i32>} : memref<1x256xf32, #tpu.memory_space<vmem>>, vector<1x256xf32>,
    return
  }
  func.func @transform_0(%arg0: i32) -> (i32, i32) {
    %c0_i32 = arith.constant 0 : i32
    %c0_i32_0 = arith.constant 0 : i32
    return %c0_i32, %arg0 : i32, i32
  }
  func.func @transform_1(%arg0: i32) -> (i32, i32) {
    %c0_i32 = arith.constant 0 : i32
    %c0_i32_0 = arith.constant 0 : i32
    %c0_i32_1 = arith.constant 0 : i32
    return %c0_i32, %c0_i32_0 : i32, i32
  }
  func.func @transform_2(%arg0: i32) -> (i32, i32) {
    %c0_i32 = arith.constant 0 : i32
    %c0_i32_0 = arith.constant 0 : i32
    %c0_i32_1 = arith.constant 0 : i32
    return %c0_i32, %c0_i32_0 : i32, i32
  }
  func.func @transform_3(%arg0: i32) -> (i32, i32) {
    %c0_i32 = arith.constant 0 : i32
    %c0_i32_0 = arith.constant 0 : i32
    %c0_i32_1 = arith.constant 0 : i32
    return %c0_i32, %c0_i32_0 : i32, i32
  }
  func.func @transform_4(%arg0: i32) -> (i32, i32) {
    %c0_i32 = arith.constant 0 : i32
    %c0_i32_0 = arith.constant 0 : i32
    %c0_i32_1 = arith.constant 0 : i32
    return %c0_i32, %c0_i32_0 : i32, i32
  }
  func.func @transform_5(%arg0: i32) -> (i32, i32) {
    %c0_i32 = arith.constant 0 : i32
    %c0_i32_0 = arith.constant 0 : i32
    %c0_i32_1 = arith.constant 0 : i32
    return %c0_i32, %c0_i32_0 : i32, i32
  }
  func.func @transform_6(%arg0: i32) -> (i32, i32) {
    %c0_i32 = arith.constant 0 : i32
    %c0_i32_0 = arith.constant 0 : i32
    %c0_i32_1 = arith.constant 0 : i32
    return %c0_i32, %c0_i32_0 : i32, i32
  }
  func.func @transform_7(%arg0: i32) -> (i32, i32) {
    %c0_i32 = arith.constant 0 : i32
    %c0_i32_0 = arith.constant 0 : i32
    return %c0_i32, %arg0 : i32, i32
  }
}

</mosaic_0001>

<llo_original>
// kernel: mlp_net.1
$region0: #{mlp_net.1}
  #allocation0 [shape = 'u32[]', space=smem, size = 0x4, offset = 0x4, fixed_abs, tag = 'smem constant byte address 0x4 - core index']
  #allocation1 [shape = 'u32[72,128]{1,0:T(1,128)}', space=vmem, size = 0x9000, scoped, tag = 'internal scratch']
  #allocation2 [shape = 'f32[1,1]{1,0:T(1,128)S(1)}', space=vmem, size = 0x200, scoped, tag = 'scoped memory for mlp_net.1']
  %s0 = inlined_call_operand.vmem [shape: bf16[32,256], index: 0, kind: input, shape index: {}]
  %s1 = inlined_call_operand.hbm [shape: bf16[64,32], index: 1, kind: input, shape index: {}]
  %s2 = inlined_call_operand.vmem [shape: f32[64,1], index: 2, kind: input, shape index: {}]
  %s3 = inlined_call_operand.vmem [shape: bf16[32,64], index: 3, kind: input, shape index: {}]
  %s4 = inlined_call_operand.hbm [shape: f32[32,1], index: 4, kind: input, shape index: {}]
  %s5 = inlined_call_operand.hbm [shape: f32[32,1], index: 5, kind: input, shape index: {}]
  %s6 = inlined_call_operand.<no memory space> [shape: f32[1,1], index: 6, kind: input, shape index: {}]
  %s7 = inlined_call_operand.vmem [shape: f32[1,256], index: 7, kind: output, shape index: {}]
  %s8 = sld [smem:[#allocation0]]
  $region50: #{mlp_net.1} parent=0
    _
  %s10 = ssub.s32 1, %s8
  %s11 = scalar_select 0, %s10, %s8
  %v12 = vstv %s6
  %13 = vst [vmem:[#allocation2] sm:$0x1] %v12
  $region1: #{mlp_net.1} parent=0
    #allocation3 [shape = 'u8[16384]{0}', space=vmem, size = 0x4000, scoped, tag = 'input window, operand 1, single buffered']
    #allocation4 [shape = 's32[1]{0}', space=sflag, size = 0x4, scoped, tag = 'scoped memory for mlp_net.1']
    #allocation5 [shape = 'u8[16384]{0}', space=vmem, size = 0x4000, scoped, tag = 'input window, operand 4, single buffered']
    #allocation6 [shape = 's32[1]{0}', space=sflag, size = 0x4, scoped, tag = 'scoped memory for mlp_net.1']
    #allocation7 [shape = 'u8[16384]{0}', space=vmem, size = 0x4000, scoped, tag = 'input window, operand 5, single buffered']
    %14 = vsyncpa [#allocation4], 0
    %15 = vsyncpa [#allocation6], 0
    // Predicated region
    $region2: #{mlp_net.1} parent=1 // pred_check
      _
    $region3: #{mlp_net.1} parent=1 // pred_check_branch
      %17 = sbr.rel (0) target = $region5
    $region4: #{mlp_net.1} parent=1 // pred_region
      _
    $region5: #{mlp_net.1} parent=1 // pred_fallthru
      _
    // Predicated region
    $region6: #{mlp_net.1} parent=1 // pred_check
      _
    $region7: #{mlp_net.1} parent=1 // pred_check_branch
      %19 = sbr.rel (0) target = $region9
    $region8: #{mlp_net.1} parent=1 // pred_region
      %21 = vsyncadd [#allocation4], 0
      %s22 = sshll.u32 %s1, 4
      %s23 = int_to_ptr.hbm [resolvable:$true] %s22
      %s24 = sshll.u32 [#allocation3], 4
      %s25 = int_to_ptr.vmem [resolvable:$true] %s24
      %30 = dma.hbm_to_vmem [thread:$0]  %s23, 512, %s25, [#allocation4], 64, 64, 4
    $region9: #{mlp_net.1} parent=1 // pred_fallthru
      _
    // Predicated region
    $region10: #{mlp_net.1} parent=1 // pred_check
      _
    $region11: #{mlp_net.1} parent=1 // pred_check_branch
      %32 = sbr.rel (0) target = $region13
    $region12: #{mlp_net.1} parent=1 // pred_region
      _
    $region13: #{mlp_net.1} parent=1 // pred_fallthru
      _
    // Predicated region
    $region14: #{mlp_net.1} parent=1 // pred_check
      _
    $region15: #{mlp_net.1} parent=1 // pred_check_branch
      %34 = sbr.rel (0) target = $region17
    $region16: #{mlp_net.1} parent=1 // pred_region
      _
    $region17: #{mlp_net.1} parent=1 // pred_fallthru
      _
    // Predicated region
    $region18: #{mlp_net.1} parent=1 // pred_check
      _
    $region19: #{mlp_net.1} parent=1 // pred_check_branch
      %36 = sbr.rel (0) target = $region21
    $region20: #{mlp_net.1} parent=1 // pred_region
      %38 = vsyncadd [#allocation6], 0
      %s39 = sshll.u32 %s4, 4
      %s40 = int_to_ptr.hbm [resolvable:$true] %s39
      %s41 = sshll.u32 [#allocation5], 4
      %s42 = int_to_ptr.vmem [resolvable:$true] %s41
      %47 = dma.hbm_to_vmem [thread:$0]  %s40, 512, %s42, [#allocation6], 128, 128, 8
    $region21: #{mlp_net.1} parent=1 // pred_fallthru
      _
    // Predicated region
    $region22: #{mlp_net.1} parent=1 // pred_check
      _
    $region23: #{mlp_net.1} parent=1 // pred_check_branch
      %49 = sbr.rel (0) target = $region25
    $region24: #{mlp_net.1} parent=1 // pred_region
      %51 = vsyncadd [#allocation6], 0
      %s52 = sshll.u32 %s5, 4
      %s53 = int_to_ptr.hbm [resolvable:$true] %s52
      %s54 = sshll.u32 [#allocation7], 4
      %s55 = int_to_ptr.vmem [resolvable:$true] %s54
      %60 = dma.hbm_to_vmem [thread:$0]  %s53, 512, %s55, [#allocation6], 128, 128, 8
    $region25: #{mlp_net.1} parent=1 // pred_fallthru
      _
    // Predicated region
    $region26: #{mlp_net.1} parent=1 // pred_check
      _
    $region27: #{mlp_net.1} parent=1 // pred_check_branch
      %62 = sbr.rel (0) target = $region29
    $region28: #{mlp_net.1} parent=1 // pred_region
      _
    $region29: #{mlp_net.1} parent=1 // pred_fallthru
      _
    // Predicated region
    $region30: #{mlp_net.1} parent=1 // pred_check
      _
    $region31: #{mlp_net.1} parent=1 // pred_check_branch
      %64 = sbr.rel (0) target = $region33
    $region32: #{mlp_net.1} parent=1 // pred_region
      %66 = dma.done [#allocation4], 512
    $region33: #{mlp_net.1} parent=1 // pred_fallthru
      _
    // Predicated region
    $region34: #{mlp_net.1} parent=1 // pred_check
      _
    $region35: #{mlp_net.1} parent=1 // pred_check_branch
      %68 = sbr.rel (0) target = $region37
    $region36: #{mlp_net.1} parent=1 // pred_region
      %70 = dma.done [#allocation6], 512
    $region37: #{mlp_net.1} parent=1 // pred_fallthru
      _
    // Predicated region
    $region38: #{mlp_net.1} parent=1 // pred_check
      _
    $region39: #{mlp_net.1} parent=1 // pred_check_branch
      %72 = sbr.rel (0) target = $region41
    $region40: #{mlp_net.1} parent=1 // pred_region
      %74 = dma.done [#allocation6], 512
    $region41: #{mlp_net.1} parent=1 // pred_fallthru
      _
    %v76 = vld [vmem:[%s0] sm:$0xff]
    %v77 = vld [vmem:[%s0 + $0x8] sm:$0xff]
    %v78 = vld [vmem:[%s0 + $0x10] sm:$0xff]
    %v79 = vld [vmem:[%s0 + $0x18] sm:$0xff]
    %v80 = vld [vmem:[#allocation3] sm:$0xf]
    %v81 = vld [vmem:[#allocation3 + $0x4] sm:$0xf]
    %v82 = vld [vmem:[#allocation3 + $0x8] sm:$0xf]
    %v83 = vld [vmem:[#allocation3 + $0xc] sm:$0xf]
    %v84 = vld [vmem:[#allocation3 + $0x10] sm:$0xf]
    %v85 = vld [vmem:[#allocation3 + $0x14] sm:$0xf]
    %v86 = vld [vmem:[#allocation3 + $0x18] sm:$0xf]
    %v87 = vld [vmem:[#allocation3 + $0x1c] sm:$0xf]
    %v88 = vld [vmem:[%s2] sm:$0xff]
    %v89 = vld [vmem:[%s2 + $0x8] sm:$0xff]
    %v90 = vld [vmem:[%s2 + $0x10] sm:$0xff]
    %v91 = vld [vmem:[%s2 + $0x18] sm:$0xff]
    %v92 = vld [vmem:[%s2 + $0x20] sm:$0xff]
    %v93 = vld [vmem:[%s2 + $0x28] sm:$0xff]
    %v94 = vld [vmem:[%s2 + $0x30] sm:$0xff]
    %v95 = vld [vmem:[%s2 + $0x38] sm:$0xff]
    %97 = vset.pattern.permute.xlu0 0
    %98 = vperm.xlu0 %97, %v88
    %v99 = vpop.permute.xlu0 %98
    %102 = vset.pattern.permute.xlu0 0
    %103 = vperm.xlu0 %102, %v89
    %v104 = vpop.permute.xlu0 %103
    %107 = vset.pattern.permute.xlu0 0
    %108 = vperm.xlu0 %107, %v90
    %v109 = vpop.permute.xlu0 %108
    %112 = vset.pattern.permute.xlu0 0
    %113 = vperm.xlu0 %112, %v91
    %v114 = vpop.permute.xlu0 %113
    %117 = vset.pattern.permute.xlu0 0
    %118 = vperm.xlu0 %117, %v92
    %v119 = vpop.permute.xlu0 %118
    %122 = vset.pattern.permute.xlu0 0
    %123 = vperm.xlu0 %122, %v93
    %v124 = vpop.permute.xlu0 %123
    %127 = vset.pattern.permute.xlu0 0
    %128 = vperm.xlu0 %127, %v94
    %v129 = vpop.permute.xlu0 %128
    %132 = vset.pattern.permute.xlu0 0
    %133 = vperm.xlu0 %132, %v95
    %v134 = vpop.permute.xlu0 %133
    %v144 = vunpack.c.l.b16 %v80
    %v145 = vunpack.c.l.b16 %v81
    %v146 = vunpack.c.l.b16 %v82
    %v147 = vunpack.c.l.b16 %v83
    %v148 = vunpack.c.l.b16 %v84
    %v149 = vunpack.c.l.b16 %v85
    %v150 = vunpack.c.l.b16 %v86
    %v151 = vunpack.c.l.b16 %v87
    %v152 = vpack.c.b16 %v145, %v144
    %v153 = vpack.c.b16 %v147, %v146
    %v154 = vpack.c.b16 %v149, %v148
    %v155 = vpack.c.b16 %v151, %v150
    %v160 = vunpack.c.l.b16 %v76
    %v161 = vunpack.c.h.b16 %v76
    %v162 = vunpack.c.l.b16 %v77
    %v163 = vunpack.c.h.b16 %v77
    %v164 = vunpack.c.l.b16 %v78
    %v165 = vunpack.c.h.b16 %v78
    %v166 = vunpack.c.l.b16 %v79
    %v167 = vunpack.c.h.b16 %v79
    %v168 = vpack.c.b16 %v162, %v160
    %v169 = vpack.c.b16 %v163, %v161
    %v170 = vpack.c.b16 %v166, %v164
    %v171 = vpack.c.b16 %v167, %v165
    %vm176 = vcmask 261120
    %v178 = vsel %vm176, %v152, 0
    %v181 = vsel %vm176, %v153, 0
    %v184 = vsel %vm176, %v154, 0
    %v187 = vsel %vm176, %v155, 0
    %189 = vmatpush.bf16.msra.mxu0 0
    %190 = vmatpush.bf16.msra.mxu0 0
    %191 = vmatpush.bf16.msra.mxu0 0
    %192 = vmatpush.bf16.msra.mxu0 0
    %193 = vmatpush.bf16.msra.mxu0 0
    %194 = vmatpush.bf16.msra.mxu0 0
    %195 = vmatpush.bf16.msra.mxu0 %v170
    %196 = vmatpush.bf16.msra.mxu0 %v168
    %197 = vmatmul.bf16.gmra.mxu0 %v178
    %v198 = vpop.f32.mrf.mxu0
    %v199 = vadd.f32 %v99, %v198
    %v200 = vpop.f32.mrf.mxu0
    %v201 = vadd.f32 %v104, %v200
    %202 = vmatmul.bf16.gmra.mxu0 %v181
    %v203 = vpop.f32.mrf.mxu0
    %v204 = vadd.f32 %v109, %v203
    %v205 = vpop.f32.mrf.mxu0
    %v206 = vadd.f32 %v114, %v205
    %207 = vmatmul.bf16.gmra.mxu0 %v184
    %v208 = vpop.f32.mrf.mxu0
    %v209 = vadd.f32 %v119, %v208
    %v210 = vpop.f32.mrf.mxu0
    %v211 = vadd.f32 %v124, %v210
    %212 = vmatmul.bf16.gmra.mxu0 %v187
    %v213 = vpop.f32.mrf.mxu0
    %v214 = vadd.f32 %v129, %v213
    %v215 = vpop.f32.mrf.mxu0
    %v216 = vadd.f32 %v134, %v215
    %217 = vdwg.mxu0
    %218 = vmatpush.bf16.msra.mxu0 0
    %219 = vmatpush.bf16.msra.mxu0 0
    %220 = vmatpush.bf16.msra.mxu0 0
    %221 = vmatpush.bf16.msra.mxu0 0
    %222 = vmatpush.bf16.msra.mxu0 0
    %223 = vmatpush.bf16.msra.mxu0 0
    %224 = vmatpush.bf16.msra.mxu0 %v171
    %225 = vmatpush.bf16.msra.mxu0 %v169
    %226 = vmatmul.bf16.gmra.mxu0 %v178
    %v227 = vpop.f32.mrf.mxu0
    %v228 = vadd.f32 %v99, %v227
    %v229 = vpop.f32.mrf.mxu0
    %v230 = vadd.f32 %v104, %v229
    %231 = vmatmul.bf16.gmra.mxu0 %v181
    %v232 = vpop.f32.mrf.mxu0
    %v233 = vadd.f32 %v109, %v232
    %v234 = vpop.f32.mrf.mxu0
    %v235 = vadd.f32 %v114, %v234
    %236 = vmatmul.bf16.gmra.mxu0 %v184
    %v237 = vpop.f32.mrf.mxu0
    %v238 = vadd.f32 %v119, %v237
    %v239 = vpop.f32.mrf.mxu0
    %v240 = vadd.f32 %v124, %v239
    %241 = vmatmul.bf16.gmra.mxu0 %v187
    %v242 = vpop.f32.mrf.mxu0
    %v243 = vadd.f32 %v129, %v242
    %v244 = vpop.f32.mrf.mxu0
    %v245 = vadd.f32 %v134, %v244
    %246 = vdwg.mxu0
    %v247 = vmax.f32 %v199, 0.0
    %v248 = vmax.f32 %v228, 0.0
    %v249 = vmax.f32 %v201, 0.0
    %v250 = vmax.f32 %v230, 0.0
    %v251 = vmax.f32 %v204, 0.0
    %v252 = vmax.f32 %v233, 0.0
    %v253 = vmax.f32 %v206, 0.0
    %v254 = vmax.f32 %v235, 0.0
    %v255 = vmax.f32 %v209, 0.0
    %v256 = vmax.f32 %v238, 0.0
    %v257 = vmax.f32 %v211, 0.0
    %v258 = vmax.f32 %v240, 0.0
    %v259 = vmax.f32 %v214, 0.0
    %v260 = vmax.f32 %v243, 0.0
    %v261 = vmax.f32 %v216, 0.0
    %v262 = vmax.f32 %v245, 0.0
    %v263 = vld [vmem:[%s3] sm:$0xf]
    %v264 = vld [vmem:[%s3 + $0x4] sm:$0xf]
    %v265 = vld [vmem:[%s3 + $0x8] sm:$0xf]
    %v266 = vld [vmem:[%s3 + $0xc] sm:$0xf]
    %v267 = vpack.c.bf16 %v249, %v247
    %v268 = vpack.c.bf16 %v250, %v248
    %v269 = vpack.c.bf16 %v253, %v251
    %v270 = vpack.c.bf16 %v254, %v252
    %v271 = vpack.c.bf16 %v257, %v255
    %v272 = vpack.c.bf16 %v258, %v256
    %v273 = vpack.c.bf16 %v261, %v259
    %v274 = vpack.c.bf16 %v262, %v260
    %v275 = vld [vmem:[#allocation5] sm:$0xff]
    %v276 = vld [vmem:[#allocation5 + $0x8] sm:$0xff]
    %v277 = vld [vmem:[#allocation5 + $0x10] sm:$0xff]
    %v278 = vld [vmem:[#allocation5 + $0x18] sm:$0xff]
    %280 = vset.pattern.permute.xlu0 0
    %281 = vperm.xlu0 %280, %v275
    %v282 = vpop.permute.xlu0 %281
    %285 = vset.pattern.permute.xlu0 0
    %286 = vperm.xlu0 %285, %v276
    %v287 = vpop.permute.xlu0 %286
    %290 = vset.pattern.permute.xlu0 0
    %291 = vperm.xlu0 %290, %v277
    %v292 = vpop.permute.xlu0 %291
    %295 = vset.pattern.permute.xlu0 0
    %296 = vperm.xlu0 %295, %v278
    %v297 = vpop.permute.xlu0 %296
    %v303 = vunpack.c.l.b16 %v263
    %v304 = vunpack.c.l.b16 %v264
    %v305 = vunpack.c.l.b16 %v265
    %v306 = vunpack.c.l.b16 %v266
    %v307 = vpack.c.b16 %v304, %v303
    %v308 = vpack.c.b16 %v306, %v305
    %vm309 = vcmask 523264
    %v311 = vsel %vm309, %v307, 0
    %v314 = vsel %vm309, %v308, 0
    %316 = vmatpush.bf16.msra.mxu0 0
    %317 = vmatpush.bf16.msra.mxu0 0
    %318 = vmatpush.bf16.msra.mxu0 0
    %319 = vmatpush.bf16.msra.mxu0 0
    %320 = vmatpush.bf16.msra.mxu0 %v273
    %321 = vmatpush.bf16.msra.mxu0 %v271
    %322 = vmatpush.bf16.msra.mxu0 %v269
    %323 = vmatpush.bf16.msra.mxu0 %v267
    %324 = vmatmul.bf16.gmra.mxu0 %v311
    %v325 = vpop.f32.mrf.mxu0
    %v326 = vadd.f32 %v282, %v325
    %v327 = vpop.f32.mrf.mxu0
    %v328 = vadd.f32 %v287, %v327
    %329 = vmatmul.bf16.gmra.mxu0 %v314
    %v330 = vpop.f32.mrf.mxu0
    %v331 = vadd.f32 %v292, %v330
    %v332 = vpop.f32.mrf.mxu0
    %v333 = vadd.f32 %v297, %v332
    %334 = vdwg.mxu0
    %335 = vmatpush.bf16.msra.mxu0 0
    %336 = vmatpush.bf16.msra.mxu0 0
    %337 = vmatpush.bf16.msra.mxu0 0
    %338 = vmatpush.bf16.msra.mxu0 0
    %339 = vmatpush.bf16.msra.mxu0 %v274
    %340 = vmatpush.bf16.msra.mxu0 %v272
    %341 = vmatpush.bf16.msra.mxu0 %v270
    %342 = vmatpush.bf16.msra.mxu0 %v268
    %343 = vmatmul.bf16.gmra.mxu0 %v311
    %v344 = vpop.f32.mrf.mxu0
    %v345 = vadd.f32 %v282, %v344
    %v346 = vpop.f32.mrf.mxu0
    %v347 = vadd.f32 %v287, %v346
    %348 = vmatmul.bf16.gmra.mxu0 %v314
    %v349 = vpop.f32.mrf.mxu0
    %v350 = vadd.f32 %v292, %v349
    %v351 = vpop.f32.mrf.mxu0
    %v352 = vadd.f32 %v297, %v351
    %353 = vdwg.mxu0
    %v354 = vmax.f32 %v326, 0.0
    %v355 = vmax.f32 %v345, 0.0
    %v356 = vmax.f32 %v328, 0.0
    %v357 = vmax.f32 %v347, 0.0
    %v358 = vmax.f32 %v331, 0.0
    %v359 = vmax.f32 %v350, 0.0
    %v360 = vmax.f32 %v333, 0.0
    %v361 = vmax.f32 %v352, 0.0
    %v362 = vld [vmem:[#allocation7] sm:$0xff]
    %v363 = vld [vmem:[#allocation7 + $0x8] sm:$0xff]
    %v364 = vld [vmem:[#allocation7 + $0x10] sm:$0xff]
    %v365 = vld [vmem:[#allocation7 + $0x18] sm:$0xff]
    %367 = vset.pattern.permute.xlu0 0
    %368 = vperm.xlu0 %367, %v362
    %v369 = vpop.permute.xlu0 %368
    %372 = vset.pattern.permute.xlu0 0
    %373 = vperm.xlu0 %372, %v363
    %v374 = vpop.permute.xlu0 %373
    %377 = vset.pattern.permute.xlu0 0
    %378 = vperm.xlu0 %377, %v364
    %v379 = vpop.permute.xlu0 %378
    %382 = vset.pattern.permute.xlu0 0
    %383 = vperm.xlu0 %382, %v365
    %v384 = vpop.permute.xlu0 %383
    %v386 = vmul.f32 %v354, %v369
    %v387 = vmul.f32 %v355, %v369
    %v388 = vmul.f32 %v356, %v374
    %v389 = vmul.f32 %v357, %v374
    %v390 = vmul.f32 %v358, %v379
    %v391 = vmul.f32 %v359, %v379
    %v392 = vmul.f32 %v360, %v384
    %v393 = vmul.f32 %v361, %v384
    %v394 = vadd.f32 %v386, %v388
    %v395 = vadd.f32 %v394, %v390
    %v396 = vadd.f32 %v395, %v392
    %v397 = vrot.slane %v396, 4
    %v398 = vadd.f32 %v396, %v397
    %v399 = vrot.slane %v398, 2
    %v400 = vadd.f32 %v398, %v399
    %v401 = vrot.slane %v400, 1
    %v402 = vadd.f32 %v400, %v401
    %v403 = vadd.f32 %v387, %v389
    %v404 = vadd.f32 %v403, %v391
    %v405 = vadd.f32 %v404, %v393
    %v406 = vrot.slane %v405, 4
    %v407 = vadd.f32 %v405, %v406
    %v408 = vrot.slane %v407, 2
    %v409 = vadd.f32 %v407, %v408
    %v410 = vrot.slane %v409, 1
    %v411 = vadd.f32 %v409, %v410
    %v412 = vld [vmem:[#allocation2] sm:$0x1]
    %414 = vset.pattern.permute.xlu0 0
    %415 = vperm.xlu0 %414, %v412
    %v416 = vpop.permute.xlu0 %415
    %v418 = vperm.slane %v416, 0
    %v419 = vadd.f32 %v402, %v418
    %v420 = vadd.f32 %v411, %v418
    %v421 = vxor.u32 %v419, 2147483648
    %v422 = vxor.u32 %v420, 2147483648
    %v423 = vmul.f32 %v421, 1.442695
    %v424 = vpow.pop %v423
    %v425 = vmul.f32 %v422, 1.442695
    %v426 = vpow.pop %v425
    %v427 = vadd.f32 %v424, 1.0
    %v428 = vadd.f32 %v426, 1.0
    %v429 = vrcp.pop %v427
    %v430 = vmul.f32 %v427, %v429
    %v431 = vsub.f32 1.0, %v430
    %v432 = vmul.f32 %v429, %v431
    %v433 = vadd.f32 %v429, %v432
    %vm434 = vweird.f32 %v427
    %vm435 = vweird.f32 %v429
    %vm436 = vmor %vm434, %vm435
    %v437 = vsel %vm436, %v429, %v433
    %v438 = vand.u32 2147483647, %v427
    %vm439 = vcmp.eq.f32.partialorder %v438, 8.507059e+37
    %v440 = vand.u32 %v427, 2147483648
    %v441 = vor.u32 1.1754944e-38, %v440
    %v442 = vsel %vm439, %v441, %v437
    %v443 = vmul.f32 1.0, %v442
    %v444 = vrcp.pop %v428
    %v445 = vmul.f32 %v428, %v444
    %v446 = vsub.f32 1.0, %v445
    %v447 = vmul.f32 %v444, %v446
    %v448 = vadd.f32 %v444, %v447
    %vm449 = vweird.f32 %v428
    %vm450 = vweird.f32 %v444
    %vm451 = vmor %vm449, %vm450
    %v452 = vsel %vm451, %v444, %v448
    %v453 = vand.u32 2147483647, %v428
    %vm454 = vcmp.eq.f32.partialorder %v453, 8.507059e+37
    %v455 = vand.u32 %v428, 2147483648
    %v456 = vor.u32 1.1754944e-38, %v455
    %v457 = vsel %vm454, %v456, %v452
    %v458 = vmul.f32 1.0, %v457
    %v461 = vrot.slane %v458, 7
    %vm462 = vcmask 1040384
    %v463 = vsel %vm462, %v443, %v461
    %v465 = vlaneseq
    %vm466 = vcmp.ge.s32.totalorder %v465, 0
    %vm467 = vcmp.lt.s32.totalorder %v465, 256
    %vm468 = vmand %vm466, %vm467
    %469 = vst.msk [vmem:[%s7] sm:$0x3] %vm468, %v463
    // Predicated region
    $region42: #{mlp_net.1} parent=1 // pred_check
      _
    $region43: #{mlp_net.1} parent=1 // pred_check_branch
      %471 = sbr.rel (0) target = $region45
    $region44: #{mlp_net.1} parent=1 // pred_region
      _
    $region45: #{mlp_net.1} parent=1 // pred_fallthru
      _
    // Predicated region
    $region46: #{mlp_net.1} parent=1 // pred_check
      _
    $region47: #{mlp_net.1} parent=1 // pred_check_branch
      %473 = sbr.rel (0) target = $region49
    $region48: #{mlp_net.1} parent=1 // pred_region
      _
    $region49: #{mlp_net.1} parent=1 // pred_fallthru
      _
    %474 = vsyncpa [#allocation4], 1
    %475 = vsyncpa [#allocation6], 1

</llo_original>
